<compile_context>
chip_gen: v5e
topology: v5e:2x2
jax: 0.10.0
libtpu: 0.0.40
codegen_flags: <defaults>
</compile_context>

<pallas_src>
import math
import jax
import jax.numpy as jnp
from jax.experimental import pallas as pl
from jax.experimental.pallas import tpu as pltpu

MAX_BATCH_TILE = 1024   # per-step VMEM at F=64: tb*F*4B <= 256 KiB per buffer


def _round_up(x, m):
    return (x + m - 1) // m * m


def _cdiv(a, b):
    return (a + b - 1) // b


# -------------------- fused MLP kernel --------------------

def _qnet_kernel(x_ref, w_ref, b_ref, o_ref):
    """x_ref: (tb, state_size)  w_ref: (L, F, F)  b_ref: (L, 1, F)
    o_ref: (tb, action_size)

    Fully fused MLP: L matmuls on the MXU with f32 accumulation, ReLU on all
    but the last layer (matches forward_net1 / forward_net2).  The layer loop
    is a static Python unroll (L = 3 or 4).  Layer 0 multiplies against the
    aligned static sublane slice w_ref[0, :state_size, :] so the input never
    has to be lane-padded in HBM; only the first action_size lanes of the
    final activation are stored.
    """
    num_layers = w_ref.shape[0]
    state_size = x_ref.shape[1]
    action_size = o_ref.shape[1]

    h = x_ref[...]
    for i in range(num_layers):
        w = w_ref[0, :state_size, :] if i == 0 else w_ref[i]
        h = jnp.dot(h, w, preferred_element_type=jnp.float32) + b_ref[i]
        if i < num_layers - 1:
            h = jnp.maximum(h, 0.0)
    o_ref[...] = h[:, :action_size].astype(o_ref.dtype)


# -------------------- parameter init (deterministic, PyTorch-like) --------------------
# TODO(synk): torch.manual_seed's exact RNG stream is not reproducible in JAX;
# we use jax.random with PyTorch's default U(-1/sqrt(fan_in)) Linear init.

def _init_linear(key, fan_in, fan_out, dtype=jnp.float32):
    kw, kb = jax.random.split(key)
    bound = 1.0 / math.sqrt(fan_in)
    w = jax.random.uniform(kw, (fan_in, fan_out), dtype, minval=-bound, maxval=bound)
    b = jax.random.uniform(kb, (fan_out,), dtype, minval=-bound, maxval=bound)
    return w, b


def init_qnetwork_params(state_size, action_size, seed, network_name):
    key = jax.random.PRNGKey(seed)
    if network_name == 'net1':
        dims = [state_size, 64, 64, action_size]
    elif network_name == 'net2':
        dims = [state_size, 64, 64, 64, action_size]
    else:
        raise ValueError('Network Name not Understood')
    keys = jax.random.split(key, len(dims) - 1)
    return [_init_linear(k, din, dout)
            for k, din, dout in zip(keys, dims[:-1], dims[1:])]


def pack_qnetwork_params(layers):
    """One-time packing: zero-pad every layer to (F, F)/(1, F) f32 with
    F = round_up(max feature dim, 8) (= 64 here, not 128) and stack, so the
    kernel receives exactly two weight operands (2 DMAs instead of 7-9) with
    ~4x less zero-padding traffic than a 128-lane pack."""
    num_layers = len(layers)
    state_size = layers[0][0].shape[0]
    action_size = layers[-1][0].shape[1]
    feat = _round_up(max(max(w.shape[0], w.shape[1]) for w, _ in layers), 8)
    w_packed = jnp.zeros((num_layers, feat, feat), jnp.float32)
    b_packed = jnp.zeros((num_layers, 1, feat), jnp.float32)
    for i, (w, b) in enumerate(layers):
        w_packed = w_packed.at[i, :w.shape[0], :w.shape[1]].set(w.astype(jnp.float32))
        b_packed = b_packed.at[i, 0, :b.shape[0]].set(b.astype(jnp.float32))
    return {
        'w': w_packed,
        'b': b_packed,
        'state_size': state_size,
        'action_size': action_size,
        'feat': feat,
    }


# -------------------- pallas_call wrapper --------------------

def _choose_batch_tile(batch):
    if batch <= 8:
        return batch            # single block == full first dim (always legal)
    # Multiple of 8; aim for >= 2 blocks so v7x's two TensorCores both get
    # work, capped so pipeline overhead is amortized and VMEM stays tiny.
    half = _round_up(_cdiv(batch, 2), 8)
    return max(8, min(MAX_BATCH_TILE, half))


def qnetwork_forward(x, packed):
    """Forward pass of QNetwork via a single fused Pallas kernel.

    x: (batch, state_size) float32
    packed: output of pack_qnetwork_params
    returns: (batch, action_size) float32
    """
    w, b = packed['w'], packed['b']
    state_size = packed['state_size']
    action_size = packed['action_size']
    num_layers, feat, _ = w.shape
    batch = x.shape[0]
    assert x.shape[1] == state_size

    tb = _choose_batch_tile(batch)
    grid = (_cdiv(batch, tb),)   # partial last block is handled by Pallas

    return pl.pallas_call(
        _qnet_kernel,
        out_shape=jax.ShapeDtypeStruct((batch, action_size), jnp.float32),
        grid=grid,
        in_specs=[
            # Compact input: last dim equals the full array dim (< 128 is legal).
            pl.BlockSpec((tb, state_size), lambda i: (i, 0)),
            # Constant block index -> weights/biases DMA'd once, stay resident.
            # (pipeline_mode=pl.Buffered(1) would drop the spare buffer; it is
            # not a perf lever here so we keep the default.)
            pl.BlockSpec((num_layers, feat, feat), lambda i: (0, 0, 0)),
            pl.BlockSpec((num_layers, 1, feat), lambda i: (0, 0, 0)),
        ],
        # Compact output: only action_size lanes ever hit HBM.
        out_specs=pl.BlockSpec((tb, action_size), lambda i: (i, 0)),
        compiler_params=pltpu.CompilerParams(
            dimension_semantics=("parallel",)),  # v7x: batch tiles over 2 TCs
    )(x.astype(jnp.float32), w, b)


# -------------------- plain-JAX reference --------------------

def qnetwork_ref(x, layers):
    h = x
    for i, (w, b) in enumerate(layers):
        h = h @ w + b
        if i < len(layers) - 1:
            h = jax.nn.relu(h)
    return h


# -------------------- main --------------------

if __name__ == "__main__":
    state_size = 8
    action_size = 4
    seed = 0
    key = jax.random.PRNGKey(0)

    ok = True
    for name in ('net1', 'net2'):
        layers = init_qnetwork_params(state_size, action_size, seed, name)
        packed = pack_qnetwork_params(layers)

        for batch in (2, 16):   # 16 exercises the multi-block "parallel" grid
            kx = jax.random.fold_in(key, batch)
            x = jax.random.normal(kx, (batch, state_size), dtype=jnp.float32)

            out = jax.block_until_ready(qnetwork_forward(x, packed))
            ref = qnetwork_ref(x, layers)

            if out.shape != (batch, action_size):
                ok = False
            if not jnp.allclose(out, ref, atol=1e-4, rtol=1e-4):
                ok = False

    if ok:
        print("KERNEL_OK")
</pallas_src>

<mosaic_0001>
module attributes {stable_mosaic.version = 11 : i64} {
  func.func @_qnet_kernel(%arg0: i32, %arg1: memref<2x8xf32, #tpu.memory_space<vmem>>, %arg2: memref<3x64x64xf32, #tpu.memory_space<vmem>>, %arg3: memref<3x1x64xf32, #tpu.memory_space<vmem>>, %arg4: memref<2x4xf32, #tpu.memory_space<vmem>>) attributes {dimension_semantics = [#tpu.dimension_semantics<parallel>], iteration_bounds = array<i64: 1>, scalar_prefetch = 0 : i64, scratch_operands = 0 : i64, tpu.core_type = #tpu.core_type<tc>, window_params = [{transform_indices = @transform_0, window_bounds = array<i64: 2, 8>}, {pipeline_mode = #tpu.pipeline_mode<synchronous>, transform_indices = @transform_1, window_bounds = array<i64: 3, 64, 64>}, {pipeline_mode = #tpu.pipeline_mode<synchronous>, transform_indices = @transform_2, window_bounds = array<i64: 3, 1, 64>}, {transform_indices = @transform_3, window_bounds = array<i64: 2, 4>}]} {
    %c0 = arith.constant 0 : index
    %c0_0 = arith.constant 0 : index
    %0 = vector.load %arg1[%c0, %c0_0] : memref<2x8xf32, #tpu.memory_space<vmem>>, vector<2x8xf32>
    %c0_1 = arith.constant 0 : index
    %c0_2 = arith.constant 0 : index
    %c0_3 = arith.constant 0 : index
    %1 = vector.load %arg2[%c0_1, %c0_2, %c0_3] : memref<3x64x64xf32, #tpu.memory_space<vmem>>, vector<1x8x64xf32>
    %2 = vector.shape_cast %1 : vector<1x8x64xf32> to vector<8x64xf32>
    %cst = arith.constant dense<0.000000e+00> : vector<2x64xf32>
    %3 = tpu.matmul %0, %2, %cst {dimension_numbers = #tpu.dot_dimension_numbers<[1], [0], [0], [1], [0, 0, 1, 1], [], []>} : vector<2x8xf32>, vector<8x64xf32>, vector<2x64xf32> -> vector<2x64xf32>
    %c0_4 = arith.constant 0 : index
    %c0_5 = arith.constant 0 : index
    %c0_6 = arith.constant 0 : index
    %4 = vector.load %arg3[%c0_4, %c0_5, %c0_6] : memref<3x1x64xf32, #tpu.memory_space<vmem>>, vector<1x1x64xf32>
    %5 = vector.shape_cast %4 : vector<1x1x64xf32> to vector<1x64xf32>
    %6 = vector.broadcast %5 : vector<1x64xf32> to vector<2x64xf32>
    %7 = arith.addf %3, %6 : vector<2x64xf32>
    %cst_7 = arith.constant 0.000000e+00 : f32
    %8 = vector.broadcast %cst_7 : f32 to vector<2x64xf32>
    %9 = arith.maximumf %7, %8 : vector<2x64xf32>
    %c1 = arith.constant 1 : index
    %c0_8 = arith.constant 0 : index
    %c0_9 = arith.constant 0 : index
    %10 = vector.load %arg2[%c1, %c0_8, %c0_9] : memref<3x64x64xf32, #tpu.memory_space<vmem>>, vector<1x64x64xf32>
    %11 = vector.shape_cast %10 : vector<1x64x64xf32> to vector<64x64xf32>
    %cst_10 = arith.constant dense<0.000000e+00> : vector<2x64xf32>
    %12 = tpu.matmul %9, %11, %cst_10 {dimension_numbers = #tpu.dot_dimension_numbers<[1], [0], [0], [1], [0, 0, 1, 1], [], []>} : vector<2x64xf32>, vector<64x64xf32>, vector<2x64xf32> -> vector<2x64xf32>
    %c1_11 = arith.constant 1 : index
    %c0_12 = arith.constant 0 : index
    %c0_13 = arith.constant 0 : index
    %13 = vector.load %arg3[%c1_11, %c0_12, %c0_13] : memref<3x1x64xf32, #tpu.memory_space<vmem>>, vector<1x1x64xf32>
    %14 = vector.shape_cast %13 : vector<1x1x64xf32> to vector<1x64xf32>
    %15 = vector.broadcast %14 : vector<1x64xf32> to vector<2x64xf32>
    %16 = arith.addf %12, %15 : vector<2x64xf32>
    %cst_14 = arith.constant 0.000000e+00 : f32
    %17 = vector.broadcast %cst_14 : f32 to vector<2x64xf32>
    %18 = arith.maximumf %16, %17 : vector<2x64xf32>
    %c2 = arith.constant 2 : index
    %c0_15 = arith.constant 0 : index
    %c0_16 = arith.constant 0 : index
    %19 = vector.load %arg2[%c2, %c0_15, %c0_16] : memref<3x64x64xf32, #tpu.memory_space<vmem>>, vector<1x64x64xf32>
    %20 = vector.shape_cast %19 : vector<1x64x64xf32> to vector<64x64xf32>
    %cst_17 = arith.constant dense<0.000000e+00> : vector<2x64xf32>
    %21 = tpu.matmul %18, %20, %cst_17 {dimension_numbers = #tpu.dot_dimension_numbers<[1], [0], [0], [1], [0, 0, 1, 1], [], []>} : vector<2x64xf32>, vector<64x64xf32>, vector<2x64xf32> -> vector<2x64xf32>
    %c2_18 = arith.constant 2 : index
    %c0_19 = arith.constant 0 : index
    %c0_20 = arith.constant 0 : index
    %22 = vector.load %arg3[%c2_18, %c0_19, %c0_20] : memref<3x1x64xf32, #tpu.memory_space<vmem>>, vector<1x1x64xf32>
    %23 = vector.shape_cast %22 : vector<1x1x64xf32> to vector<1x64xf32>
    %24 = vector.broadcast %23 : vector<1x64xf32> to vector<2x64xf32>
    %25 = arith.addf %21, %24 : vector<2x64xf32>
    %26 = vector.extract_strided_slice %25 {offsets = [0, 0], sizes = [2, 4], strides = [1, 1]} : vector<2x64xf32> to vector<2x4xf32>
    %c0_21 = arith.constant 0 : index
    %c0_22 = arith.constant 0 : index
    %27 = vector.load %arg4[%c0_21, %c0_22] : memref<2x4xf32, #tpu.memory_space<vmem>>, vector<2x4xf32>
    tpu.vector_store %arg4[%c0_21, %c0_22], %26 {strides = array<i32>} : memref<2x4xf32, #tpu.memory_space<vmem>>, vector<2x4xf32>,
    return
  }
  func.func @transform_0(%arg0: i32) -> (i32, i32) {
    %c0_i32 = arith.constant 0 : i32
    %c0_i32_0 = arith.constant 0 : i32
    return %arg0, %c0_i32 : i32, i32
  }
  func.func @transform_1(%arg0: i32) -> (i32, i32, i32) {
    %c0_i32 = arith.constant 0 : i32
    %c0_i32_0 = arith.constant 0 : i32
    %c0_i32_1 = arith.constant 0 : i32
    %c0_i32_2 = arith.constant 0 : i32
    return %c0_i32, %c0_i32_0, %c0_i32_1 : i32, i32, i32
  }
  func.func @transform_2(%arg0: i32) -> (i32, i32, i32) {
    %c0_i32 = arith.constant 0 : i32
    %c0_i32_0 = arith.constant 0 : i32
    %c0_i32_1 = arith.constant 0 : i32
    %c0_i32_2 = arith.constant 0 : i32
    return %c0_i32, %c0_i32_0, %c0_i32_1 : i32, i32, i32
  }
  func.func @transform_3(%arg0: i32) -> (i32, i32) {
    %c0_i32 = arith.constant 0 : i32
    %c0_i32_0 = arith.constant 0 : i32
    return %arg0, %c0_i32 : i32, i32
  }
}

</mosaic_0001>

<llo_original>
// kernel: tpu_custom_call.1
$region0: #{tpu_custom_call.1}
  #allocation0 [shape = 'u32[]', space=smem, size = 0x4, offset = 0x4, fixed_abs, tag = 'smem constant byte address 0x4 - core index']
  #allocation1 [shape = 'u32[72,128]{1,0:T(1,128)}', space=vmem, size = 0x9000, scoped, tag = 'internal scratch']
  %s0 = inlined_call_operand.hbm [shape: f32[2,8], index: 0, kind: input, shape index: {}]
  %s1 = inlined_call_operand.hbm [shape: f32[3,64,64], index: 1, kind: input, shape index: {}]
  %s2 = inlined_call_operand.hbm [shape: f32[3,1,64], index: 2, kind: input, shape index: {}]
  %s3 = inlined_call_operand.hbm [shape: f32[2,4], index: 3, kind: output, shape index: {}]
  %s4 = sld [smem:[#allocation0]]
  $region34: #{tpu_custom_call.1} parent=0
    _
  %s6 = ssub.s32 1, %s4
  %s7 = scalar_select 0, %s6, %s4
  $region1: #{tpu_custom_call.1} parent=0
    #allocation2 [shape = 'u8[1024]{0}', space=vmem, size = 0x400, scoped, tag = 'input window, operand 0, single buffered']
    #allocation3 [shape = 's32[1]{0}', space=sflag, size = 0x4, scoped, tag = 'scoped memory for tpu_custom_call.1']
    #allocation4 [shape = 's32[1]{0}', space=sflag, size = 0x4, scoped, tag = 'scoped memory for tpu_custom_call.1']
    #allocation5 [shape = 'u8[98304]{0}', space=vmem, size = 0x18000, scoped, tag = 'input window, operand 1, single buffered']
    #allocation6 [shape = 's32[1]{0}', space=sflag, size = 0x4, scoped, tag = 'scoped memory for tpu_custom_call.1']
    #allocation7 [shape = 'u8[1536]{0}', space=vmem, size = 0x800, scoped, tag = 'input window, operand 2, single buffered']
    #allocation8 [shape = 'u8[1024]{0}', space=vmem, size = 0x400, scoped, tag = 'output window, operand 0, single buffered']
    %8 = vsyncpa [#allocation3], 0
    %9 = vsyncpa [#allocation6], 0
    %10 = vsyncpa [#allocation4], 0
    // Predicated region
    $region2: #{tpu_custom_call.1} parent=1 // pred_check
      _
    $region3: #{tpu_custom_call.1} parent=1 // pred_check_branch
      %12 = sbr.rel (0) target = $region5
    $region4: #{tpu_custom_call.1} parent=1 // pred_region
      %14 = vsyncadd [#allocation3], 0
      %s16 = sshll.u32 %s0, 4
      %s17 = int_to_ptr.hbm [resolvable:$true] %s16
      %s18 = sshll.u32 [#allocation2], 4
      %s19 = int_to_ptr.vmem [resolvable:$true] %s18
      %21 = dma.hbm_to_vmem [thread:$0]  %s17, 32, %s19, [#allocation3]
    $region5: #{tpu_custom_call.1} parent=1 // pred_fallthru
      _
    // Predicated region
    $region6: #{tpu_custom_call.1} parent=1 // pred_check
      _
    $region7: #{tpu_custom_call.1} parent=1 // pred_check_branch
      %23 = sbr.rel (0) target = $region9
    $region8: #{tpu_custom_call.1} parent=1 // pred_region
      %25 = vsyncadd [#allocation6], 0
      %s26 = sshll.u32 %s1, 4
      %s27 = int_to_ptr.hbm [resolvable:$true] %s26
      %s28 = sshll.u32 [#allocation5], 4
      %s29 = int_to_ptr.vmem [resolvable:$true] %s28
      %34 = dma.hbm_to_vmem [thread:$0]  %s27, 3072, %s29, [#allocation6], 128, 128, 8
    $region9: #{tpu_custom_call.1} parent=1 // pred_fallthru
      _
    // Predicated region
    $region10: #{tpu_custom_call.1} parent=1 // pred_check
      _
    $region11: #{tpu_custom_call.1} parent=1 // pred_check_branch
      %36 = sbr.rel (0) target = $region13
    $region12: #{tpu_custom_call.1} parent=1 // pred_region
      %38 = vsyncadd [#allocation6], 0
      %s39 = sshll.u32 %s2, 4
      %s40 = int_to_ptr.hbm [resolvable:$true] %s39
      %s41 = sshll.u32 [#allocation7], 4
      %s42 = int_to_ptr.vmem [resolvable:$true] %s41
      %47 = dma.hbm_to_vmem [thread:$0]  %s40, 48, %s42, [#allocation6], 16, 16, 1
    $region13: #{tpu_custom_call.1} parent=1 // pred_fallthru
      _
    // Predicated region
    $region14: #{tpu_custom_call.1} parent=1 // pred_check
      _
    $region15: #{tpu_custom_call.1} parent=1 // pred_check_branch
      %49 = sbr.rel (0) target = $region17
    $region16: #{tpu_custom_call.1} parent=1 // pred_region
      %51 = dma.done [#allocation3], 32
    $region17: #{tpu_custom_call.1} parent=1 // pred_fallthru
      _
    // Predicated region
    $region18: #{tpu_custom_call.1} parent=1 // pred_check
      _
    $region19: #{tpu_custom_call.1} parent=1 // pred_check_branch
      %53 = sbr.rel (0) target = $region21
    $region20: #{tpu_custom_call.1} parent=1 // pred_region
      %55 = dma.done [#allocation6], 3072
    $region21: #{tpu_custom_call.1} parent=1 // pred_fallthru
      _
    // Predicated region
    $region22: #{tpu_custom_call.1} parent=1 // pred_check
      _
    $region23: #{tpu_custom_call.1} parent=1 // pred_check_branch
      %57 = sbr.rel (0) target = $region25
    $region24: #{tpu_custom_call.1} parent=1 // pred_region
      %59 = dma.done [#allocation6], 48
    $region25: #{tpu_custom_call.1} parent=1 // pred_fallthru
      _
    %v60 = vld [vmem:[#allocation2] sm:$0x3]
    %v61 = vld [vmem:[#allocation5] sm:$0xff]
    %v62 = vld [vmem:[#allocation7] sm:$0x1]
    %v64 = vperm.slane %v62, 0
    %vm66 = vcmask 64512
    %v68 = vsel %vm66, %v60, 0
    %70 = vmatpush.msra.mxu0 0.0
    %71 = vmatpush.msra.mxu0 0.0
    %72 = vmatpush.msra.mxu0 0.0
    %73 = vmatpush.msra.mxu0 0.0
    %74 = vmatpush.msra.mxu0 0.0
    %75 = vmatpush.msra.mxu0 0.0
    %76 = vmatpush.msra.mxu0 0.0
    %77 = vmatpush.msra.mxu0 0.0
    %78 = vmatpush.msra.mxu0 0.0
    %79 = vmatpush.msra.mxu0 0.0
    %80 = vmatpush.msra.mxu0 0.0
    %81 = vmatpush.msra.mxu0 0.0
    %82 = vmatpush.msra.mxu0 0.0
    %83 = vmatpush.msra.mxu0 0.0
    %84 = vmatpush.msra.mxu0 0.0
    %85 = vmatpush.msra.mxu0 %v61
    %86 = vmatmul.f32.gmra.mxu0 %v68
    %v87 = vpop.f32.mrf.mxu0
    %v88 = vadd.f32 %v64, %v87
    %89 = vdwg.mxu0
    %v90 = vmax.f32 %v88, 0.0
    %s91 = scalar_lea.vmem [#allocation5], 64
    %v92 = vld [vmem:[%s91] sm:$0xff]
    %v93 = vld [vmem:[%s91 + $0x8] sm:$0xff]
    %v94 = vld [vmem:[%s91 + $0x10] sm:$0xff]
    %v95 = vld [vmem:[%s91 + $0x18] sm:$0xff]
    %v96 = vld [vmem:[%s91 + $0x20] sm:$0xff]
    %v97 = vld [vmem:[%s91 + $0x28] sm:$0xff]
    %v98 = vld [vmem:[%s91 + $0x30] sm:$0xff]
    %v99 = vld [vmem:[%s91 + $0x38] sm:$0xff]
    %s100 = scalar_lea.vmem [#allocation7], 1
    %v101 = vld [vmem:[%s100] sm:$0x1]
    %v103 = vperm.slane %v101, 0
    %vm105 = vcmask 523264
    %v107 = vsel %vm105, %v90, 0
    %109 = vmatpush.msra.mxu0 0.0
    %110 = vmatpush.msra.mxu0 0.0
    %111 = vmatpush.msra.mxu0 0.0
    %112 = vmatpush.msra.mxu0 0.0
    %113 = vmatpush.msra.mxu0 0.0
    %114 = vmatpush.msra.mxu0 0.0
    %115 = vmatpush.msra.mxu0 0.0
    %116 = vmatpush.msra.mxu0 0.0
    %117 = vmatpush.msra.mxu0 %v99
    %118 = vmatpush.msra.mxu0 %v98
    %119 = vmatpush.msra.mxu0 %v97
    %120 = vmatpush.msra.mxu0 %v96
    %121 = vmatpush.msra.mxu0 %v95
    %122 = vmatpush.msra.mxu0 %v94
    %123 = vmatpush.msra.mxu0 %v93
    %124 = vmatpush.msra.mxu0 %v92
    %125 = vmatmul.f32.gmra.mxu0 %v107
    %v126 = vpop.f32.mrf.mxu0
    %v127 = vadd.f32 %v103, %v126
    %128 = vdwg.mxu0
    %v129 = vmax.f32 %v127, 0.0
    %s130 = scalar_lea.vmem [#allocation5], 128
    %v131 = vld [vmem:[%s130] sm:$0xff]
    %v132 = vld [vmem:[%s130 + $0x8] sm:$0xff]
    %v133 = vld [vmem:[%s130 + $0x10] sm:$0xff]
    %v134 = vld [vmem:[%s130 + $0x18] sm:$0xff]
    %v135 = vld [vmem:[%s130 + $0x20] sm:$0xff]
    %v136 = vld [vmem:[%s130 + $0x28] sm:$0xff]
    %v137 = vld [vmem:[%s130 + $0x30] sm:$0xff]
    %v138 = vld [vmem:[%s130 + $0x38] sm:$0xff]
    %s139 = scalar_lea.vmem [#allocation7], 2
    %v140 = vld [vmem:[%s139] sm:$0x1]
    %v142 = vperm.slane %v140, 0
    %v145 = vsel %vm105, %v129, 0
    %147 = vmatpush.msra.mxu0 0.0
    %148 = vmatpush.msra.mxu0 0.0
    %149 = vmatpush.msra.mxu0 0.0
    %150 = vmatpush.msra.mxu0 0.0
    %151 = vmatpush.msra.mxu0 0.0
    %152 = vmatpush.msra.mxu0 0.0
    %153 = vmatpush.msra.mxu0 0.0
    %154 = vmatpush.msra.mxu0 0.0
    %155 = vmatpush.msra.mxu0 %v138
    %156 = vmatpush.msra.mxu0 %v137
    %157 = vmatpush.msra.mxu0 %v136
    %158 = vmatpush.msra.mxu0 %v135
    %159 = vmatpush.msra.mxu0 %v134
    %160 = vmatpush.msra.mxu0 %v133
    %161 = vmatpush.msra.mxu0 %v132
    %162 = vmatpush.msra.mxu0 %v131
    %163 = vmatmul.f32.gmra.mxu0 %v145
    %v164 = vpop.f32.mrf.mxu0
    %v165 = vadd.f32 %v142, %v164
    %166 = vdwg.mxu0
    %vm167 = vcmask 25600
    %168 = vst.msk [vmem:[#allocation8] sm:$0x3] %vm167, %v165
    // Predicated region
    $region26: #{tpu_custom_call.1} parent=1 // pred_check
      _
    $region27: #{tpu_custom_call.1} parent=1 // pred_check_branch
      %170 = sbr.rel (0) target = $region29
    $region28: #{tpu_custom_call.1} parent=1 // pred_region
      %172 = vsyncadd [#allocation4], 0
      %s174 = sshll.u32 [#allocation8], 4
      %s175 = int_to_ptr.vmem [resolvable:$true] %s174
      %s176 = sshll.u32 %s3, 4
      %s177 = int_to_ptr.hbm [resolvable:$true] %s176
      %179 = dma.vmem_to_hbm [thread:$0]  %s175, 32, %s177, [#allocation4]
    $region29: #{tpu_custom_call.1} parent=1 // pred_fallthru
      _
    // Predicated region
    $region30: #{tpu_custom_call.1} parent=1 // pred_check
      _
    $region31: #{tpu_custom_call.1} parent=1 // pred_check_branch
      %181 = sbr.rel (0) target = $region33
    $region32: #{tpu_custom_call.1} parent=1 // pred_region
      %183 = dma.done [#allocation4], 32
    $region33: #{tpu_custom_call.1} parent=1 // pred_fallthru
      _
    %184 = vsyncpa [#allocation3], 1
    %185 = vsyncpa [#allocation6], 1
    %186 = vsyncpa [#allocation4], 1

</llo_original>
